<compile_context>
chip_gen: v6e
topology: v6e:2x2x1
jax: 0.10.0
libtpu: 0.0.40
codegen_flags: <defaults>
</compile_context>

<pallas_src>
import functools

import jax
import jax.numpy as jnp
from jax import lax
from jax.experimental import pallas as pl
from jax.experimental.pallas import tpu as pltpu


def _conv3x3_relu_kernel(x_ref, w_ref, b_ref, o_ref, patches_ref, *, H, W):
    # x_ref:       (Cin, H*W)     one image; channels on sublanes, flat spatial on lanes
    # w_ref:       (Cout, 9*Cin)  weight, K ordered as (kh, kw, cin)
    # b_ref:       (Cout, 1)
    # o_ref:       (Cout, H*W)
    # patches_ref: (9*Cin, H*W)   VMEM scratch: im2col matrix
    Cin, HW = x_ref.shape

    x = x_ref[...]

    # Flat-position iota; only the W-periodic (column) index needs extra math.
    pos = lax.broadcasted_iota(jnp.int32, (Cin, HW), 1)
    if (W & (W - 1)) == 0:
        w_idx = jnp.bitwise_and(pos, W - 1)        # cheap path for power-of-two W
    else:
        w_idx = pos % W

    # Build the im2col matrix: 9 shifted (and halo-masked) copies of x.
    tap = 0
    for dh in (-1, 0, 1):
        for dw in (-1, 0, 1):
            d = dh * W + dw                         # flat-index offset of this tap
            if d == 0:
                shifted = x
            else:
                # want shifted[p] = x[p + d]  =>  circular roll by (-d) mod HW
                shifted = pltpu.roll(x, (-d) % HW, 1)
            conds = []
            if dh == -1:
                conds.append(pos >= W)              # h >= 1
            elif dh == 1:
                conds.append(pos < (H - 1) * W)     # h <= H-2
            if dw == -1:
                conds.append(w_idx >= 1)            # w >= 1
            elif dw == 1:
                conds.append(w_idx < W - 1)         # w <= W-2
            if conds:
                mask = conds[0]
                for c in conds[1:]:
                    mask = jnp.logical_and(mask, c)
                shifted = jnp.where(mask, shifted, 0.0)
            patches_ref[tap * Cin:(tap + 1) * Cin, :] = shifted   # 16-sublane aligned
            tap += 1

    # Single MXU matmul: (Cout, 9*Cin) x (9*Cin, H*W) -> (Cout, H*W), f32 acc.
    acc = jnp.dot(w_ref[...], patches_ref[...],
                  preferred_element_type=jnp.float32)
    out = jnp.maximum(acc + b_ref[...], 0.0)
    o_ref[...] = out.astype(o_ref.dtype)


@jax.jit
def large_module_forward(x_nchw, weight_oihw, bias):
    """x_nchw: (N, 16, H, W); weight_oihw: (16, 16, 3, 3); bias: (16,)."""
    N, Cin, H, W = x_nchw.shape
    Cout = weight_oihw.shape[0]
    HW = H * W

    # Metadata-only view + tiny weight repack (no large HBM passes).
    x_flat = x_nchw.reshape(N, Cin, HW)
    # W2[co, (kh*3 + kw)*Cin + ci] = weight[co, ci, kh, kw]
    w2 = jnp.transpose(weight_oihw, (0, 2, 3, 1)).reshape(Cout, 9 * Cin)
    b2 = bias.reshape(Cout, 1).astype(jnp.float32)

    kernel = functools.partial(_conv3x3_relu_kernel, H=H, W=W)

    # TODO(synk): for large images (scratch (144, H*W) f32 beyond scoped VMEM,
    # e.g. >~512x512 on v7x/v5e) add an H-tile grid axis with a 1-row halo.
    out_flat = pl.pallas_call(
        kernel,
        out_shape=jax.ShapeDtypeStruct((N, Cout, HW), x_nchw.dtype),
        grid_spec=pltpu.PrefetchScalarGridSpec(
            num_scalar_prefetch=0,
            grid=(N,),
            in_specs=[
                pl.BlockSpec((None, Cin, HW), lambda b: (b, 0, 0)),
                pl.BlockSpec((Cout, 9 * Cin), lambda b: (0, 0)),
                pl.BlockSpec((Cout, 1), lambda b: (0, 0)),
            ],
            out_specs=pl.BlockSpec((None, Cout, HW), lambda b: (b, 0, 0)),
            scratch_shapes=[pltpu.VMEM((9 * Cin, HW), jnp.float32)],
        ),
        compiler_params=pltpu.CompilerParams(
            dimension_semantics=("parallel",),
        ),
    )(x_flat, w2, b2)

    return out_flat.reshape(N, Cout, H, W)


def init_params(key):
    # Matches nn.Conv2d(16, 16, 3, 1, 1) with xavier_uniform_ weight, bias = 0.01.
    Cout, Cin, K = 16, 16, 3
    fan_in = Cin * K * K
    fan_out = Cout * K * K
    bound = (6.0 / (fan_in + fan_out)) ** 0.5
    weight = jax.random.uniform(
        key, (Cout, Cin, K, K), minval=-bound, maxval=bound, dtype=jnp.float32
    )
    bias = jnp.full((Cout,), 0.01, dtype=jnp.float32)
    return weight, bias


if __name__ == "__main__":
    key = jax.random.PRNGKey(0)
    k_w, k_x = jax.random.split(key)

    weight, bias = init_params(k_w)
    # Module requires 16 input channels.
    x = jax.random.normal(k_x, (2, 16, 16, 16), dtype=jnp.float32)  # (N, C, H, W)

    out = large_module_forward(x, weight, bias)
    out = jax.block_until_ready(out)

    # Reference: XLA conv with the same semantics as the PyTorch module.
    ref = lax.conv_general_dilated(
        x, weight, window_strides=(1, 1), padding=((1, 1), (1, 1)),
        dimension_numbers=("NCHW", "OIHW", "NCHW"),
    ) + bias.reshape(1, -1, 1, 1)
    ref = jnp.maximum(ref, 0.0)

    assert out.shape == (2, 16, 16, 16)
    assert jnp.max(jnp.abs(out - ref)) < 1e-3

    print("KERNEL_OK")
</pallas_src>

<mosaic_0001>
module attributes {stable_mosaic.version = 11 : i64} {
  func.func @_conv3x3_relu_kernel(%arg0: i32, %arg1: memref<1x16x256xf32, #tpu.memory_space<vmem>>, %arg2: memref<16x144xf32, #tpu.memory_space<vmem>>, %arg3: memref<16x1xf32, #tpu.memory_space<vmem>>, %arg4: memref<1x16x256xf32, #tpu.memory_space<vmem>>, %arg5: memref<144x256xf32, #tpu.memory_space<vmem>>) attributes {dimension_semantics = [#tpu.dimension_semantics<parallel>], iteration_bounds = array<i64: 2>, scalar_prefetch = 0 : i64, scratch_operands = 1 : i64, tpu.core_type = #tpu.core_type<tc>, window_params = [{transform_indices = @transform_0, window_bounds = array<i64: 1, 16, 256>}, {pipeline_mode = #tpu.pipeline_mode<synchronous>, transform_indices = @transform_1, window_bounds = array<i64: 16, 144>}, {pipeline_mode = #tpu.pipeline_mode<synchronous>, transform_indices = @transform_2, window_bounds = array<i64: 16, 1>}, {transform_indices = @transform_3, window_bounds = array<i64: 1, 16, 256>}]} {
    %c0 = arith.constant 0 : index
    %c0_0 = arith.constant 0 : index
    %c0_1 = arith.constant 0 : index
    %0 = vector.load %arg1[%c0, %c0_0, %c0_1] : memref<1x16x256xf32, #tpu.memory_space<vmem>>, vector<1x16x256xf32>
    %1 = vector.shape_cast %0 : vector<1x16x256xf32> to vector<16x256xf32>
    %2 = tpu.iota {dimensions = array<i32: 1>} : vector<16x256xi32>
    %c15_i32 = arith.constant 15 : i32
    %3 = vector.broadcast %c15_i32 : i32 to vector<16x256xi32>
    %4 = arith.andi %2, %3 : vector<16x256xi32>
    %c17_i32 = arith.constant 17 : i32
    %5 = tpu.dynamic_rotate %1 by %c17_i32 dim 1 : vector<16x256xf32>, i32 -> vector<16x256xf32>
    %c16_i32 = arith.constant 16 : i32
    %6 = vector.broadcast %c16_i32 : i32 to vector<16x256xi32>
    %7 = arith.cmpi sge, %2, %6 : vector<16x256xi32>
    %c1_i32 = arith.constant 1 : i32
    %8 = vector.broadcast %c1_i32 : i32 to vector<16x256xi32>
    %9 = arith.cmpi sge, %4, %8 : vector<16x256xi32>
    %10 = arith.andi %7, %9 : vector<16x256xi1>
    %cst = arith.constant 0.000000e+00 : f32
    %11 = vector.broadcast %cst : f32 to vector<16x256xf32>
    %12 = arith.select %10, %5, %11 : vector<16x256xi1>, vector<16x256xf32>
    %c0_2 = arith.constant 0 : index
    %c0_3 = arith.constant 0 : index
    %13 = vector.load %arg5[%c0_2, %c0_3] : memref<144x256xf32, #tpu.memory_space<vmem>>, vector<16x256xf32>
    tpu.vector_store %arg5[%c0_2, %c0_3], %12 {strides = array<i32>} : memref<144x256xf32, #tpu.memory_space<vmem>>, vector<16x256xf32>,
    %c16_i32_4 = arith.constant 16 : i32
    %14 = tpu.dynamic_rotate %1 by %c16_i32_4 dim 1 : vector<16x256xf32>, i32 -> vector<16x256xf32>
    %c16_i32_5 = arith.constant 16 : i32
    %15 = vector.broadcast %c16_i32_5 : i32 to vector<16x256xi32>
    %16 = arith.cmpi sge, %2, %15 : vector<16x256xi32>
    %cst_6 = arith.constant 0.000000e+00 : f32
    %17 = vector.broadcast %cst_6 : f32 to vector<16x256xf32>
    %18 = arith.select %16, %14, %17 : vector<16x256xi1>, vector<16x256xf32>
    %c16 = arith.constant 16 : index
    %c0_7 = arith.constant 0 : index
    %19 = vector.load %arg5[%c16, %c0_7] : memref<144x256xf32, #tpu.memory_space<vmem>>, vector<16x256xf32>
    tpu.vector_store %arg5[%c16, %c0_7], %18 {strides = array<i32>} : memref<144x256xf32, #tpu.memory_space<vmem>>, vector<16x256xf32>,
    %c15_i32_8 = arith.constant 15 : i32
    %20 = tpu.dynamic_rotate %1 by %c15_i32_8 dim 1 : vector<16x256xf32>, i32 -> vector<16x256xf32>
    %c16_i32_9 = arith.constant 16 : i32
    %21 = vector.broadcast %c16_i32_9 : i32 to vector<16x256xi32>
    %22 = arith.cmpi sge, %2, %21 : vector<16x256xi32>
    %c15_i32_10 = arith.constant 15 : i32
    %23 = vector.broadcast %c15_i32_10 : i32 to vector<16x256xi32>
    %24 = arith.cmpi slt, %4, %23 : vector<16x256xi32>
    %25 = arith.andi %22, %24 : vector<16x256xi1>
    %cst_11 = arith.constant 0.000000e+00 : f32
    %26 = vector.broadcast %cst_11 : f32 to vector<16x256xf32>
    %27 = arith.select %25, %20, %26 : vector<16x256xi1>, vector<16x256xf32>
    %c32 = arith.constant 32 : index
    %c0_12 = arith.constant 0 : index
    %28 = vector.load %arg5[%c32, %c0_12] : memref<144x256xf32, #tpu.memory_space<vmem>>, vector<16x256xf32>
    tpu.vector_store %arg5[%c32, %c0_12], %27 {strides = array<i32>} : memref<144x256xf32, #tpu.memory_space<vmem>>, vector<16x256xf32>,
    %c1_i32_13 = arith.constant 1 : i32
    %29 = tpu.dynamic_rotate %1 by %c1_i32_13 dim 1 : vector<16x256xf32>, i32 -> vector<16x256xf32>
    %c1_i32_14 = arith.constant 1 : i32
    %30 = vector.broadcast %c1_i32_14 : i32 to vector<16x256xi32>
    %31 = arith.cmpi sge, %4, %30 : vector<16x256xi32>
    %cst_15 = arith.constant 0.000000e+00 : f32
    %32 = vector.broadcast %cst_15 : f32 to vector<16x256xf32>
    %33 = arith.select %31, %29, %32 : vector<16x256xi1>, vector<16x256xf32>
    %c48 = arith.constant 48 : index
    %c0_16 = arith.constant 0 : index
    %34 = vector.load %arg5[%c48, %c0_16] : memref<144x256xf32, #tpu.memory_space<vmem>>, vector<16x256xf32>
    tpu.vector_store %arg5[%c48, %c0_16], %33 {strides = array<i32>} : memref<144x256xf32, #tpu.memory_space<vmem>>, vector<16x256xf32>,
    %c64 = arith.constant 64 : index
    %c0_17 = arith.constant 0 : index
    %35 = vector.load %arg5[%c64, %c0_17] : memref<144x256xf32, #tpu.memory_space<vmem>>, vector<16x256xf32>
    tpu.vector_store %arg5[%c64, %c0_17], %1 {strides = array<i32>} : memref<144x256xf32, #tpu.memory_space<vmem>>, vector<16x256xf32>,
    %c255_i32 = arith.constant 255 : i32
    %36 = tpu.dynamic_rotate %1 by %c255_i32 dim 1 : vector<16x256xf32>, i32 -> vector<16x256xf32>
    %c15_i32_18 = arith.constant 15 : i32
    %37 = vector.broadcast %c15_i32_18 : i32 to vector<16x256xi32>
    %38 = arith.cmpi slt, %4, %37 : vector<16x256xi32>
    %cst_19 = arith.constant 0.000000e+00 : f32
    %39 = vector.broadcast %cst_19 : f32 to vector<16x256xf32>
    %40 = arith.select %38, %36, %39 : vector<16x256xi1>, vector<16x256xf32>
    %c80 = arith.constant 80 : index
    %c0_20 = arith.constant 0 : index
    %41 = vector.load %arg5[%c80, %c0_20] : memref<144x256xf32, #tpu.memory_space<vmem>>, vector<16x256xf32>
    tpu.vector_store %arg5[%c80, %c0_20], %40 {strides = array<i32>} : memref<144x256xf32, #tpu.memory_space<vmem>>, vector<16x256xf32>,
    %c241_i32 = arith.constant 241 : i32
    %42 = tpu.dynamic_rotate %1 by %c241_i32 dim 1 : vector<16x256xf32>, i32 -> vector<16x256xf32>
    %c240_i32 = arith.constant 240 : i32
    %43 = vector.broadcast %c240_i32 : i32 to vector<16x256xi32>
    %44 = arith.cmpi slt, %2, %43 : vector<16x256xi32>
    %c1_i32_21 = arith.constant 1 : i32
    %45 = vector.broadcast %c1_i32_21 : i32 to vector<16x256xi32>
    %46 = arith.cmpi sge, %4, %45 : vector<16x256xi32>
    %47 = arith.andi %44, %46 : vector<16x256xi1>
    %cst_22 = arith.constant 0.000000e+00 : f32
    %48 = vector.broadcast %cst_22 : f32 to vector<16x256xf32>
    %49 = arith.select %47, %42, %48 : vector<16x256xi1>, vector<16x256xf32>
    %c96 = arith.constant 96 : index
    %c0_23 = arith.constant 0 : index
    %50 = vector.load %arg5[%c96, %c0_23] : memref<144x256xf32, #tpu.memory_space<vmem>>, vector<16x256xf32>
    tpu.vector_store %arg5[%c96, %c0_23], %49 {strides = array<i32>} : memref<144x256xf32, #tpu.memory_space<vmem>>, vector<16x256xf32>,
    %c240_i32_24 = arith.constant 240 : i32
    %51 = tpu.dynamic_rotate %1 by %c240_i32_24 dim 1 : vector<16x256xf32>, i32 -> vector<16x256xf32>
    %c240_i32_25 = arith.constant 240 : i32
    %52 = vector.broadcast %c240_i32_25 : i32 to vector<16x256xi32>
    %53 = arith.cmpi slt, %2, %52 : vector<16x256xi32>
    %cst_26 = arith.constant 0.000000e+00 : f32
    %54 = vector.broadcast %cst_26 : f32 to vector<16x256xf32>
    %55 = arith.select %53, %51, %54 : vector<16x256xi1>, vector<16x256xf32>
    %c112 = arith.constant 112 : index
    %c0_27 = arith.constant 0 : index
    %56 = vector.load %arg5[%c112, %c0_27] : memref<144x256xf32, #tpu.memory_space<vmem>>, vector<16x256xf32>
    tpu.vector_store %arg5[%c112, %c0_27], %55 {strides = array<i32>} : memref<144x256xf32, #tpu.memory_space<vmem>>, vector<16x256xf32>,
    %c239_i32 = arith.constant 239 : i32
    %57 = tpu.dynamic_rotate %1 by %c239_i32 dim 1 : vector<16x256xf32>, i32 -> vector<16x256xf32>
    %c240_i32_28 = arith.constant 240 : i32
    %58 = vector.broadcast %c240_i32_28 : i32 to vector<16x256xi32>
    %59 = arith.cmpi slt, %2, %58 : vector<16x256xi32>
    %c15_i32_29 = arith.constant 15 : i32
    %60 = vector.broadcast %c15_i32_29 : i32 to vector<16x256xi32>
    %61 = arith.cmpi slt, %4, %60 : vector<16x256xi32>
    %62 = arith.andi %59, %61 : vector<16x256xi1>
    %cst_30 = arith.constant 0.000000e+00 : f32
    %63 = vector.broadcast %cst_30 : f32 to vector<16x256xf32>
    %64 = arith.select %62, %57, %63 : vector<16x256xi1>, vector<16x256xf32>
    %c128 = arith.constant 128 : index
    %c0_31 = arith.constant 0 : index
    %65 = vector.load %arg5[%c128, %c0_31] : memref<144x256xf32, #tpu.memory_space<vmem>>, vector<16x256xf32>
    tpu.vector_store %arg5[%c128, %c0_31], %64 {strides = array<i32>} : memref<144x256xf32, #tpu.memory_space<vmem>>, vector<16x256xf32>,
    %c0_32 = arith.constant 0 : index
    %c0_33 = arith.constant 0 : index
    %66 = vector.load %arg2[%c0_32, %c0_33] : memref<16x144xf32, #tpu.memory_space<vmem>>, vector<16x144xf32>
    %c0_34 = arith.constant 0 : index
    %c0_35 = arith.constant 0 : index
    %67 = vector.load %arg5[%c0_34, %c0_35] : memref<144x256xf32, #tpu.memory_space<vmem>>, vector<144x256xf32>
    %cst_36 = arith.constant dense<0.000000e+00> : vector<16x256xf32>
    %68 = tpu.matmul %66, %67, %cst_36 {dimension_numbers = #tpu.dot_dimension_numbers<[1], [0], [0], [1], [0, 0, 1, 1], [], []>} : vector<16x144xf32>, vector<144x256xf32>, vector<16x256xf32> -> vector<16x256xf32>
    %c0_37 = arith.constant 0 : index
    %c0_38 = arith.constant 0 : index
    %69 = vector.load %arg3[%c0_37, %c0_38] : memref<16x1xf32, #tpu.memory_space<vmem>>, vector<16x1xf32>
    %70 = vector.broadcast %69 : vector<16x1xf32> to vector<16x256xf32>
    %71 = arith.addf %68, %70 : vector<16x256xf32>
    %cst_39 = arith.constant 0.000000e+00 : f32
    %72 = vector.broadcast %cst_39 : f32 to vector<16x256xf32>
    %73 = arith.maximumf %71, %72 : vector<16x256xf32>
    %c0_40 = arith.constant 0 : index
    %c0_41 = arith.constant 0 : index
    %c0_42 = arith.constant 0 : index
    %74 = vector.load %arg4[%c0_40, %c0_41, %c0_42] : memref<1x16x256xf32, #tpu.memory_space<vmem>>, vector<1x16x256xf32>
    %75 = vector.shape_cast %74 : vector<1x16x256xf32> to vector<16x256xf32>
    %76 = vector.shape_cast %73 : vector<16x256xf32> to vector<1x16x256xf32>
    tpu.vector_store %arg4[%c0_40, %c0_41, %c0_42], %76 {strides = array<i32>} : memref<1x16x256xf32, #tpu.memory_space<vmem>>, vector<1x16x256xf32>,
    return
  }
  func.func @transform_0(%arg0: i32) -> (i32, i32, i32) {
    %c0_i32 = arith.constant 0 : i32
    %c0_i32_0 = arith.constant 0 : i32
    %c0_i32_1 = arith.constant 0 : i32
    return %arg0, %c0_i32, %c0_i32_0 : i32, i32, i32
  }
  func.func @transform_1(%arg0: i32) -> (i32, i32) {
    %c0_i32 = arith.constant 0 : i32
    %c0_i32_0 = arith.constant 0 : i32
    %c0_i32_1 = arith.constant 0 : i32
    return %c0_i32, %c0_i32_0 : i32, i32
  }
  func.func @transform_2(%arg0: i32) -> (i32, i32) {
    %c0_i32 = arith.constant 0 : i32
    %c0_i32_0 = arith.constant 0 : i32
    %c0_i32_1 = arith.constant 0 : i32
    return %c0_i32, %c0_i32_0 : i32, i32
  }
  func.func @transform_3(%arg0: i32) -> (i32, i32, i32) {
    %c0_i32 = arith.constant 0 : i32
    %c0_i32_0 = arith.constant 0 : i32
    %c0_i32_1 = arith.constant 0 : i32
    return %arg0, %c0_i32, %c0_i32_0 : i32, i32, i32
  }
}

</mosaic_0001>

<llo_original>
// kernel: large_module_forward.1
$region0: #{large_module_forward.1}
  #allocation0 [shape = 'u32[]', space=smem, size = 0x4, offset = 0x4, fixed_abs, tag = 'smem constant byte address 0x4 - core index']
  #allocation1 [shape = 'u32[144,128]{1,0:T(1,128)}', space=vmem, size = 0x12000, scoped, tag = 'internal scratch']
  #allocation2 [shape = 'f32[144,256]{1,0:T(8,128)}', space=vmem, size = 0x24000, scoped, tag = 'scratch operand']
  %s0 = inlined_call_operand.vmem [shape: f32[2,16,256], index: 0, kind: input, shape index: {}]
  %s1 = inlined_call_operand.vmem [shape: f32[16,144], index: 1, kind: input, shape index: {}]
  %s2 = inlined_call_operand.vmem [shape: f32[16,1], index: 2, kind: input, shape index: {}]
  %s3 = inlined_call_operand.vmem [shape: f32[2,16,256], index: 3, kind: output, shape index: {}]
  %s4 = sld [smem:[#allocation0]]
  $region45: #{large_module_forward.1} parent=0
    _
  %s6 = ssub.s32 1, %s4
  %s7 = scalar_select 0, %s6, %s4
  loop: start=0, step=1, limit=4
  $region2: #{large_module_forward.1} parent=0 // loop_pre_header
    _
  $region3: #{large_module_forward.1} parent=0 // loop_header
    %s9 = sphi 0, %s13
    %p10 = scmp.ge.s32.totalorder %s9, 4
    %s19 = sphi 0, %s21
    %s22 = sphi 0, %s19
    %s23 = sphi 0, %s22
    %s39 = sphi 0, %s23
    %s43 = sphi 0, %s43
    %s45 = sphi 0, %s43
    %s46 = sphi 0, %s45
    %s60 = sphi 0, %s46
    %s64 = sphi 0, %s64
    %s66 = sphi 0, %s64
    %s67 = sphi 0, %s66
    %s81 = sphi 0, %s67
    %s87 = sphi 0, %s89
    %s90 = sphi 0, %s87
    %s91 = sphi 0, %s90
    %s107 = sphi 0, %s91
  $region4: #{large_module_forward.1} parent=0 // loop_header_branch
    %12 = sbr.rel (%p10) target = $region8
  $region5: #{large_module_forward.1} parent=0 // loop_body
    %s14 = ssub.s32 %s9, 1
    %s15 = ssub.s32 %s9, 2
    %s16 = sadd.s32 %s9, 1
    %s17 = ssub.s32 %s9, %s16
    %p18 = scmp.eq.s32.totalorder %s17, 0
    %s20 = sadd.s32 %s19, 1
    %s21 = scalar_select %p18, %s19, %s20
    %p24 = pneg %p18
    %p25 = scmp.eq.s32.totalorder %s9, 1
    %p26 = por %p24, %p25
    %p27 = scmp.ne.s32.totalorder %s19, %s22
    %p28 = scmp.eq.s32.totalorder %s9, 0
    %p29 = por %p27, %p28
    %p30 = scmp.ne.s32.totalorder %s19, %s22
    %p31 = scmp.eq.s32.totalorder %s14, 1
    %p32 = por %p30, %p31
    %p33 = scmp.ne.s32.totalorder %s22, %s23
    %p34 = scmp.eq.s32.totalorder %s14, 0
    %p35 = por %p33, %p34
    %p36 = scmp.ne.s32.totalorder %s22, %s23
    %p37 = scmp.eq.s32.totalorder %s15, 1
    %p38 = por %p36, %p37
    %p40 = scmp.ne.s32.totalorder %s23, %s39
    %p41 = scmp.eq.s32.totalorder %s15, 0
    %p42 = por %p40, %p41
    %s44 = sadd.s32 %s43, 1
    %p47 = scmp.eq.s32.totalorder %s9, 1
    %p48 = scmp.ne.s32.totalorder %s43, %s45
    %p49 = scmp.eq.s32.totalorder %s9, 0
    %p50 = por %p48, %p49
    %p51 = scmp.ne.s32.totalorder %s43, %s45
    %p52 = scmp.eq.s32.totalorder %s14, 1
    %p53 = por %p51, %p52
    %p54 = scmp.ne.s32.totalorder %s45, %s46
    %p55 = scmp.eq.s32.totalorder %s14, 0
    %p56 = por %p54, %p55
    %p57 = scmp.ne.s32.totalorder %s45, %s46
    %p58 = scmp.eq.s32.totalorder %s15, 1
    %p59 = por %p57, %p58
    %p61 = scmp.ne.s32.totalorder %s46, %s60
    %p62 = scmp.eq.s32.totalorder %s15, 0
    %p63 = por %p61, %p62
    %s65 = sadd.s32 %s64, 1
    %p68 = scmp.eq.s32.totalorder %s9, 1
    %p69 = scmp.ne.s32.totalorder %s64, %s66
    %p70 = scmp.eq.s32.totalorder %s9, 0
    %p71 = por %p69, %p70
    %p72 = scmp.ne.s32.totalorder %s64, %s66
    %p73 = scmp.eq.s32.totalorder %s14, 1
    %p74 = por %p72, %p73
    %p75 = scmp.ne.s32.totalorder %s66, %s67
    %p76 = scmp.eq.s32.totalorder %s14, 0
    %p77 = por %p75, %p76
    %p78 = scmp.ne.s32.totalorder %s66, %s67
    %p79 = scmp.eq.s32.totalorder %s15, 1
    %p80 = por %p78, %p79
    %p82 = scmp.ne.s32.totalorder %s67, %s81
    %p83 = scmp.eq.s32.totalorder %s15, 0
    %p84 = por %p82, %p83
    %s85 = ssub.s32 %s9, %s16
    %p86 = scmp.eq.s32.totalorder %s85, 0
    %s88 = sadd.s32 %s87, 1
    %s89 = scalar_select %p86, %s87, %s88
    %p92 = pneg %p86
    %p93 = scmp.eq.s32.totalorder %s9, 1
    %p94 = por %p92, %p93
    %p95 = scmp.ne.s32.totalorder %s87, %s90
    %p96 = scmp.eq.s32.totalorder %s9, 0
    %p97 = por %p95, %p96
    %p98 = scmp.ne.s32.totalorder %s87, %s90
    %p99 = scmp.eq.s32.totalorder %s14, 1
    %p100 = por %p98, %p99
    %p101 = scmp.ne.s32.totalorder %s90, %s91
    %p102 = scmp.eq.s32.totalorder %s14, 0
    %p103 = por %p101, %p102
    %p104 = scmp.ne.s32.totalorder %s90, %s91
    %p105 = scmp.eq.s32.totalorder %s15, 1
    %p106 = por %p104, %p105
    %p108 = scmp.ne.s32.totalorder %s91, %s107
    %p109 = scmp.eq.s32.totalorder %s15, 0
    %p110 = por %p108, %p109
    %p111 = scmp.le.s32.totalorder 1, %s9
    %p112 = scmp.lt.s32.totalorder %s9, 3
    %p113 = pnand %p111, %p112
    %p114 = pneg %p113
    // Predicated region
    $region9: #{large_module_forward.1} parent=5 // pred_check
      _
    $region10: #{large_module_forward.1} parent=5 // pred_check_branch
      %116 = sbr.rel (%p113) target = $region12
    $region11: #{large_module_forward.1} parent=5 // pred_region
      %s117 = ssub.s32 %s9, 1
      // Predicated region
      $region13: #{large_module_forward.1} parent=11 // pred_check
        %p118 = pneg %p56
      $region14: #{large_module_forward.1} parent=11 // pred_check_branch
        %120 = sbr.rel (%p118) target = $region16
      $region15: #{large_module_forward.1} parent=11 // pred_region
        _
      $region16: #{large_module_forward.1} parent=11 // pred_fallthru
        _
      // Predicated region
      $region17: #{large_module_forward.1} parent=11 // pred_check
        %p121 = pneg %p77
      $region18: #{large_module_forward.1} parent=11 // pred_check_branch
        %123 = sbr.rel (%p121) target = $region20
      $region19: #{large_module_forward.1} parent=11 // pred_region
        _
      $region20: #{large_module_forward.1} parent=11 // pred_fallthru
        _
    $region12: #{large_module_forward.1} parent=5 // pred_fallthru
      _
    %p124 = scmp.lt.s32.totalorder %s9, 2
    // Predicated region
    $region21: #{large_module_forward.1} parent=5 // pred_check
      %p125 = pneg %p124
    $region22: #{large_module_forward.1} parent=5 // pred_check_branch
      %127 = sbr.rel (%p125) target = $region24
    $region23: #{large_module_forward.1} parent=5 // pred_region
      // Predicated region
      $region25: #{large_module_forward.1} parent=23 // pred_check
        %p128 = pneg %p29
      $region26: #{large_module_forward.1} parent=23 // pred_check_branch
        %130 = sbr.rel (%p128) target = $region28
      $region27: #{large_module_forward.1} parent=23 // pred_region
        %p131 = scmp.lt.s32.totalorder %s9, 1
        %s132 = scalar_select %p131, %s9, 1
        %s133 = smul.addr %s132, 4
        %s134 = smul.addr %s133, 8
        %s135 = scalar_lea.vmem %s0, %s134
      $region28: #{large_module_forward.1} parent=23 // pred_fallthru
        _
    $region24: #{large_module_forward.1} parent=5 // pred_fallthru
      _
    %p136 = scmp.le.s32.totalorder 1, %s9
    %p137 = scmp.lt.s32.totalorder %s9, 3
    %p138 = pnand %p136, %p137
    %p139 = pneg %p138
    // Predicated region
    $region29: #{large_module_forward.1} parent=5 // pred_check
      _
    $region30: #{large_module_forward.1} parent=5 // pred_check_branch
      %141 = sbr.rel (%p138) target = $region32
    $region31: #{large_module_forward.1} parent=5 // pred_region
      %s142 = ssub.s32 %s9, 1
      %p143 = scmp.lt.s32.totalorder %s14, 1
      %s144 = scalar_select %p143, %s14, 1
      %s145 = smul.addr %s144, 4
      %s146 = smul.addr %s145, 8
      %s147 = scalar_lea.vmem %s0, %s146
      %p148 = pneg %p35
      %p149 = pneg %p32
      %p150 = pneg %p56
      %p151 = pneg %p53
      %p152 = pneg %p77
      %p153 = pneg %p74
      %p154 = pneg %p103
      %p155 = pneg %p100
      %p156 = scmp.lt.s32.totalorder %s14, 1
      %s157 = scalar_select %p156, %s14, 1
      %s158 = smul.addr %s157, 4
      %s159 = smul.addr %s158, 8
      %s160 = scalar_lea.vmem %s3, %s159
      %p161 = scmp.lt.s32.totalorder %s14, 1
      %s162 = scalar_select %p161, %s14, 1
      %s163 = smul.addr %s162, 4
      %s164 = smul.addr %s163, 8
      %s165 = scalar_lea.vmem %s0, %s164
      %p166 = scmp.lt.s32.totalorder %s14, 1
      %s167 = scalar_select %p166, %s14, 1
      %s168 = smul.addr %s167, 4
      %s169 = smul.addr %s168, 8
      %s170 = scalar_lea.vmem %s3, %s169
      %v171 = vld [vmem:[%s165] sm:$0xff]
      %v172 = vld [vmem:[%s165 + $0x8] sm:$0xff]
      %v173 = vld [vmem:[%s165 + $0x10] sm:$0xff]
      %v174 = vld [vmem:[%s165 + $0x18] sm:$0xff]
      %v175 = vlaneseq
      %v176 = vand.u32 %v175, 127
      %v177 = vadd.s32 %v176, 128
      %v178 = vand.u32 %v176, 15
      %v179 = vand.u32 %v177, 15
      %180 = vrot.lane.b32.xlu0 %v171, 17
      %v181 = vpop.permute.xlu0 %180
      %182 = vrot.lane.b32.xlu0 %v173, 17
      %v183 = vpop.permute.xlu0 %182
      %184 = vrot.lane.b32.xlu0 %v172, 17
      %v185 = vpop.permute.xlu0 %184
      %186 = vrot.lane.b32.xlu0 %v174, 17
      %v187 = vpop.permute.xlu0 %186
      %vm188 = vcmp.lt.s32.totalorder %v176, 17
      %v189 = vsel %vm188, %v181, %v185
      %v190 = vsel %vm188, %v183, %v187
      %v191 = vsel %vm188, %v185, %v181
      %v192 = vsel %vm188, %v187, %v183
      %vm193 = vcmp.ge.s32.totalorder %v176, 16
      %vm194 = vcmp.ge.s32.totalorder %v177, 16
      %vm195 = vcmp.ge.s32.totalorder %v178, 1
      %vm196 = vcmp.ge.s32.totalorder %v179, 1
      %vm197 = vmand %vm193, %vm195
      %vm198 = vmand %vm194, %vm196
      %v199 = vsel %vm197, %v191, 0.0
      %v200 = vsel %vm198, %v189, 0.0
      %v201 = vsel %vm197, %v192, 0.0
      %v202 = vsel %vm198, %v190, 0.0
      %203 = vst [vmem:[#allocation2] sm:$0xff] %v199
      %204 = vst [vmem:[#allocation2 + $0x8] sm:$0xff] %v200
      %205 = vst [vmem:[#allocation2 + $0x10] sm:$0xff] %v201
      %206 = vst [vmem:[#allocation2 + $0x18] sm:$0xff] %v202
      %207 = vrot.lane.b32.xlu0 %v171, 16
      %v208 = vpop.permute.xlu0 %207
      %209 = vrot.lane.b32.xlu0 %v173, 16
      %v210 = vpop.permute.xlu0 %209
      %211 = vrot.lane.b32.xlu0 %v172, 16
      %v212 = vpop.permute.xlu0 %211
      %213 = vrot.lane.b32.xlu0 %v174, 16
      %v214 = vpop.permute.xlu0 %213
      %vm215 = vcmp.lt.s32.totalorder %v176, 16
      %v216 = vsel %vm215, %v208, %v212
      %v217 = vsel %vm215, %v210, %v214
      %v218 = vsel %vm215, %v212, %v208
      %v219 = vsel %vm215, %v214, %v210
      %v220 = vsel %vm193, %v218, 0.0
      %v221 = vsel %vm194, %v216, 0.0
      %v222 = vsel %vm193, %v219, 0.0
      %v223 = vsel %vm194, %v217, 0.0
      %224 = vst [vmem:[#allocation2 + $0x20] sm:$0xff] %v220
      %225 = vst [vmem:[#allocation2 + $0x28] sm:$0xff] %v221
      %226 = vst [vmem:[#allocation2 + $0x30] sm:$0xff] %v222
      %227 = vst [vmem:[#allocation2 + $0x38] sm:$0xff] %v223
      %228 = vrot.lane.b32.xlu0 %v171, 15
      %v229 = vpop.permute.xlu0 %228
      %230 = vrot.lane.b32.xlu0 %v173, 15
      %v231 = vpop.permute.xlu0 %230
      %232 = vrot.lane.b32.xlu0 %v172, 15
      %v233 = vpop.permute.xlu0 %232
      %234 = vrot.lane.b32.xlu0 %v174, 15
      %v235 = vpop.permute.xlu0 %234
      %vm236 = vcmp.lt.s32.totalorder %v176, 15
      %v237 = vsel %vm236, %v229, %v233
      %v238 = vsel %vm236, %v231, %v235
      %v239 = vsel %vm236, %v233, %v229
      %v240 = vsel %vm236, %v235, %v231
      %vm241 = vcmp.lt.s32.totalorder %v178, 15
      %vm242 = vcmp.lt.s32.totalorder %v179, 15
      %vm243 = vmand %vm193, %vm241
      %vm244 = vmand %vm194, %vm242
      %v245 = vsel %vm243, %v239, 0.0
      %v246 = vsel %vm244, %v237, 0.0
      %v247 = vsel %vm243, %v240, 0.0
      %v248 = vsel %vm244, %v238, 0.0
      %249 = vst [vmem:[#allocation2 + $0x40] sm:$0xff] %v245
      %250 = vst [vmem:[#allocation2 + $0x48] sm:$0xff] %v246
      %251 = vst [vmem:[#allocation2 + $0x50] sm:$0xff] %v247
      %252 = vst [vmem:[#allocation2 + $0x58] sm:$0xff] %v248
      %253 = vrot.lane.b32.xlu0 %v171, 1
      %v254 = vpop.permute.xlu0 %253
      %255 = vrot.lane.b32.xlu0 %v173, 1
      %v256 = vpop.permute.xlu0 %255
      %257 = vrot.lane.b32.xlu0 %v172, 1
      %v258 = vpop.permute.xlu0 %257
      %259 = vrot.lane.b32.xlu0 %v174, 1
      %v260 = vpop.permute.xlu0 %259
      %vm261 = vcmp.lt.s32.totalorder %v176, 1
      %v262 = vsel %vm261, %v254, %v258
      %v263 = vsel %vm261, %v256, %v260
      %v264 = vsel %vm261, %v258, %v254
      %v265 = vsel %vm261, %v260, %v256
      %v266 = vsel %vm195, %v264, 0.0
      %v267 = vsel %vm196, %v262, 0.0
      %v268 = vsel %vm195, %v265, 0.0
      %v269 = vsel %vm196, %v263, 0.0
      %270 = vst [vmem:[#allocation2 + $0x60] sm:$0xff] %v266
      %271 = vst [vmem:[#allocation2 + $0x68] sm:$0xff] %v267
      %272 = vst [vmem:[#allocation2 + $0x70] sm:$0xff] %v268
      %273 = vst [vmem:[#allocation2 + $0x78] sm:$0xff] %v269
      %274 = vst [vmem:[#allocation2 + $0x80] sm:$0xff] %v171
      %275 = vst [vmem:[#allocation2 + $0x88] sm:$0xff] %v172
      %276 = vst [vmem:[#allocation2 + $0x90] sm:$0xff] %v173
      %277 = vst [vmem:[#allocation2 + $0x98] sm:$0xff] %v174
      %278 = vrot.lane.b32.xlu0 %v171, 127
      %v279 = vpop.permute.xlu0 %278
      %280 = vrot.lane.b32.xlu0 %v173, 127
      %v281 = vpop.permute.xlu0 %280
      %282 = vrot.lane.b32.xlu0 %v172, 127
      %v283 = vpop.permute.xlu0 %282
      %284 = vrot.lane.b32.xlu0 %v174, 127
      %v285 = vpop.permute.xlu0 %284
      %vm286 = vcmp.lt.s32.totalorder %v176, 127
      %v287 = vsel %vm286, %v279, %v283
      %v288 = vsel %vm286, %v281, %v285
      %v289 = vsel %vm286, %v283, %v279
      %v290 = vsel %vm286, %v285, %v281
      %v291 = vsel %vm241, %v287, 0.0
      %v292 = vsel %vm242, %v289, 0.0
      %v293 = vsel %vm241, %v288, 0.0
      %v294 = vsel %vm242, %v290, 0.0
      %295 = vst [vmem:[#allocation2 + $0xa0] sm:$0xff] %v291
      %296 = vst [vmem:[#allocation2 + $0xa8] sm:$0xff] %v292
      %297 = vst [vmem:[#allocation2 + $0xb0] sm:$0xff] %v293
      %298 = vst [vmem:[#allocation2 + $0xb8] sm:$0xff] %v294
      %299 = vrot.lane.b32.xlu0 %v171, 113
      %v300 = vpop.permute.xlu0 %299
      %301 = vrot.lane.b32.xlu0 %v173, 113
      %v302 = vpop.permute.xlu0 %301
      %303 = vrot.lane.b32.xlu0 %v172, 113
      %v304 = vpop.permute.xlu0 %303
      %305 = vrot.lane.b32.xlu0 %v174, 113
      %v306 = vpop.permute.xlu0 %305
      %vm307 = vcmp.lt.s32.totalorder %v176, 113
      %v308 = vsel %vm307, %v300, %v304
      %v309 = vsel %vm307, %v302, %v306
      %v310 = vsel %vm307, %v304, %v300
      %v311 = vsel %vm307, %v306, %v302
      %vm312 = vcmp.lt.s32.totalorder %v176, 240
      %vm313 = vcmp.lt.s32.totalorder %v177, 240
      %vm314 = vmand %vm312, %vm195
      %vm315 = vmand %vm313, %vm196
      %v316 = vsel %vm314, %v308, 0.0
      %v317 = vsel %vm315, %v310, 0.0
      %v318 = vsel %vm314, %v309, 0.0
      %v319 = vsel %vm315, %v311, 0.0
      %320 = vst [vmem:[#allocation2 + $0xc0] sm:$0xff] %v316
      %321 = vst [vmem:[#allocation2 + $0xc8] sm:$0xff] %v317
      %322 = vst [vmem:[#allocation2 + $0xd0] sm:$0xff] %v318
      %323 = vst [vmem:[#allocation2 + $0xd8] sm:$0xff] %v319
      %324 = vrot.lane.b32.xlu0 %v171, 112
      %v325 = vpop.permute.xlu0 %324
      %326 = vrot.lane.b32.xlu0 %v173, 112
      %v327 = vpop.permute.xlu0 %326
      %328 = vrot.lane.b32.xlu0 %v172, 112
      %v329 = vpop.permute.xlu0 %328
      %330 = vrot.lane.b32.xlu0 %v174, 112
      %v331 = vpop.permute.xlu0 %330
      %vm332 = vcmp.lt.s32.totalorder %v176, 112
      %v333 = vsel %vm332, %v325, %v329
      %v334 = vsel %vm332, %v327, %v331
      %v335 = vsel %vm332, %v329, %v325
      %v336 = vsel %vm332, %v331, %v327
      %v337 = vsel %vm312, %v333, 0.0
      %v338 = vsel %vm313, %v335, 0.0
      %v339 = vsel %vm312, %v334, 0.0
      %v340 = vsel %vm313, %v336, 0.0
      %341 = vst [vmem:[#allocation2 + $0xe0] sm:$0xff] %v337
      %342 = vst [vmem:[#allocation2 + $0xe8] sm:$0xff] %v338
      %343 = vst [vmem:[#allocation2 + $0xf0] sm:$0xff] %v339
      %344 = vst [vmem:[#allocation2 + $0xf8] sm:$0xff] %v340
      %345 = vrot.lane.b32.xlu0 %v171, 111
      %v346 = vpop.permute.xlu0 %345
      %347 = vrot.lane.b32.xlu0 %v173, 111
      %v348 = vpop.permute.xlu0 %347
      %349 = vrot.lane.b32.xlu0 %v172, 111
      %v350 = vpop.permute.xlu0 %349
      %351 = vrot.lane.b32.xlu0 %v174, 111
      %v352 = vpop.permute.xlu0 %351
      %vm353 = vcmp.lt.s32.totalorder %v176, 111
      %v354 = vsel %vm353, %v346, %v350
      %v355 = vsel %vm353, %v348, %v352
      %v356 = vsel %vm353, %v350, %v346
      %v357 = vsel %vm353, %v352, %v348
      %vm358 = vmand %vm312, %vm241
      %vm359 = vmand %vm313, %vm242
      %v360 = vsel %vm358, %v354, 0.0
      %v361 = vsel %vm359, %v356, 0.0
      %v362 = vsel %vm358, %v355, 0.0
      %v363 = vsel %vm359, %v357, 0.0
      %364 = vst [vmem:[#allocation2 + $0x100] sm:$0xff] %v360
      %365 = vst [vmem:[#allocation2 + $0x108] sm:$0xff] %v361
      %366 = vst [vmem:[#allocation2 + $0x110] sm:$0xff] %v362
      %367 = vst [vmem:[#allocation2 + $0x118] sm:$0xff] %v363
      %v368 = vld [vmem:[%s1] sm:$0xff]
      %v369 = vld [vmem:[%s1 + $0x8] sm:$0xff]
      %v370 = vld [vmem:[%s1 + $0x10] sm:$0xff]
      %v371 = vld [vmem:[%s1 + $0x18] sm:$0xff]
      %v372 = vld [vmem:[#allocation2] sm:$0xff]
      %v373 = vld [vmem:[#allocation2 + $0x8] sm:$0xff]
      %v374 = vld [vmem:[#allocation2 + $0x10] sm:$0xff]
      %v375 = vld [vmem:[#allocation2 + $0x18] sm:$0xff]
      %v376 = vld [vmem:[#allocation2 + $0x20] sm:$0xff]
      %v377 = vld [vmem:[#allocation2 + $0x28] sm:$0xff]
      %v378 = vld [vmem:[#allocation2 + $0x30] sm:$0xff]
      %v379 = vld [vmem:[#allocation2 + $0x38] sm:$0xff]
      %v380 = vld [vmem:[#allocation2 + $0x40] sm:$0xff]
      %v381 = vld [vmem:[#allocation2 + $0x48] sm:$0xff]
      %v382 = vld [vmem:[#allocation2 + $0x50] sm:$0xff]
      %v383 = vld [vmem:[#allocation2 + $0x58] sm:$0xff]
      %v384 = vld [vmem:[#allocation2 + $0x60] sm:$0xff]
      %v385 = vld [vmem:[#allocation2 + $0x68] sm:$0xff]
      %v386 = vld [vmem:[#allocation2 + $0x70] sm:$0xff]
      %v387 = vld [vmem:[#allocation2 + $0x78] sm:$0xff]
      %v388 = vld [vmem:[#allocation2 + $0x80] sm:$0xff]
      %v389 = vld [vmem:[#allocation2 + $0x88] sm:$0xff]
      %v390 = vld [vmem:[#allocation2 + $0x90] sm:$0xff]
      %v391 = vld [vmem:[#allocation2 + $0x98] sm:$0xff]
      %v392 = vld [vmem:[#allocation2 + $0xa0] sm:$0xff]
      %v393 = vld [vmem:[#allocation2 + $0xa8] sm:$0xff]
      %v394 = vld [vmem:[#allocation2 + $0xb0] sm:$0xff]
      %v395 = vld [vmem:[#allocation2 + $0xb8] sm:$0xff]
      %v396 = vld [vmem:[#allocation2 + $0xc0] sm:$0xff]
      %v397 = vld [vmem:[#allocation2 + $0xc8] sm:$0xff]
      %v398 = vld [vmem:[#allocation2 + $0xd0] sm:$0xff]
      %v399 = vld [vmem:[#allocation2 + $0xd8] sm:$0xff]
      %v400 = vld [vmem:[#allocation2 + $0xe0] sm:$0xff]
      %v401 = vld [vmem:[#allocation2 + $0xe8] sm:$0xff]
      %v402 = vld [vmem:[#allocation2 + $0xf0] sm:$0xff]
      %v403 = vld [vmem:[#allocation2 + $0xf8] sm:$0xff]
      %v404 = vld [vmem:[#allocation2 + $0x100] sm:$0xff]
      %v405 = vld [vmem:[#allocation2 + $0x108] sm:$0xff]
      %v406 = vld [vmem:[#allocation2 + $0x110] sm:$0xff]
      %v407 = vld [vmem:[#allocation2 + $0x118] sm:$0xff]
      %v408 = vld [vmem:[%s2] sm:$0xff]
      %v409 = vld [vmem:[%s2 + $0x8] sm:$0xff]
      %411 = vset.pattern.permute.xlu0 0
      %412 = vperm.xlu0 %411, %v408
      %v413 = vpop.permute.xlu0 %412
      %416 = vset.pattern.permute.xlu0 0
      %417 = vperm.xlu0 %416, %v409
      %v418 = vpop.permute.xlu0 %417
      %vm420 = vcmask 130048
      %v422 = vsel %vm420, %v369, 0
      %v425 = vsel %vm420, %v371, 0
      %427 = vmatprep.subr.mxu0 %v403
      %428 = vmatpush1.msra.mxu0 %v402
      %429 = vmatprep.subr.mxu0 %v401
      %430 = vmatpush1.msra.mxu0 %v400
      %431 = vmatprep.subr.mxu0 %v399
      %432 = vmatpush1.msra.mxu0 %v398
      %433 = vmatprep.subr.mxu0 %v397
      %434 = vmatpush1.msra.mxu0 %v396
      %435 = vmatprep.subr.mxu0 %v395
      %436 = vmatpush1.msra.mxu0 %v394
      %437 = vmatprep.subr.mxu0 %v393
      %438 = vmatpush1.msra.mxu0 %v392
      %439 = vmatprep.subr.mxu0 %v391
      %440 = vmatpush1.msra.mxu0 %v390
      %441 = vmatprep.subr.mxu0 %v389
      %442 = vmatpush1.msra.mxu0 %v388
      %443 = vmatprep.subr.mxu0 %v387
      %444 = vmatpush1.msra.mxu0 %v386
      %445 = vmatprep.subr.mxu0 %v385
      %446 = vmatpush1.msra.mxu0 %v384
      %447 = vmatprep.subr.mxu0 %v383
      %448 = vmatpush1.msra.mxu0 %v382
      %449 = vmatprep.subr.mxu0 %v381
      %450 = vmatpush1.msra.mxu0 %v380
      %451 = vmatprep.subr.mxu0 %v379
      %452 = vmatpush1.msra.mxu0 %v378
      %453 = vmatprep.subr.mxu0 %v377
      %454 = vmatpush1.msra.mxu0 %v376
      %455 = vmatprep.subr.mxu0 %v375
      %456 = vmatpush1.msra.mxu0 %v374
      %457 = vmatprep.subr.mxu0 %v373
      %458 = vmatpush1.msra.mxu0 %v372
      %459 = vmatprep.subr.mxu0 0.0
      %460 = vmatpush2.msra.mxu0 0.0
      %461 = vmatprep.subr.mxu0 0.0
      %462 = vmatpush2.msra.mxu0 0.0
      %463 = vmatprep.subr.mxu0 0.0
      %464 = vmatpush2.msra.mxu0 0.0
      %465 = vmatprep.subr.mxu0 0.0
      %466 = vmatpush2.msra.mxu0 0.0
      %467 = vmatprep.subr.mxu0 0.0
      %468 = vmatpush2.msra.mxu0 0.0
      %469 = vmatprep.subr.mxu0 0.0
      %470 = vmatpush2.msra.mxu0 0.0
      %471 = vmatprep.subr.mxu0 0.0
      %472 = vmatpush2.msra.mxu0 0.0
      %473 = vmatprep.subr.mxu0 0.0
      %474 = vmatpush2.msra.mxu0 0.0
      %475 = vmatprep.subr.mxu0 0.0
      %476 = vmatpush2.msra.mxu0 0.0
      %477 = vmatprep.subr.mxu0 0.0
      %478 = vmatpush2.msra.mxu0 0.0
      %479 = vmatprep.subr.mxu0 0.0
      %480 = vmatpush2.msra.mxu0 0.0
      %481 = vmatprep.subr.mxu0 0.0
      %482 = vmatpush2.msra.mxu0 0.0
      %483 = vmatprep.subr.mxu0 0.0
      %484 = vmatpush2.msra.mxu0 0.0
      %485 = vmatprep.subr.mxu0 0.0
      %486 = vmatpush2.msra.mxu0 0.0
      %487 = vmatprep.subr.mxu0 %v407
      %488 = vmatpush2.msra.mxu0 %v406
      %489 = vmatprep.subr.mxu0 %v405
      %490 = vmatpush2.msra.mxu0 %v404
      %491 = vmatprep.mubr.f32.mxu0 %v422
      %492 = vmatmul.mubr.f32.gmra.mxu0 %v368
      %v493 = vpop.f32.mrf.mxu0
      %v494 = vadd.f32 %v413, %v493
      %v495 = vpop.f32.mrf.mxu0
      %v496 = vadd.f32 %v413, %v495
      %497 = vmatprep.mubr.f32.mxu0 %v425
      %498 = vmatmul.mubr.f32.gmra.mxu0 %v370
      %v499 = vpop.f32.mrf.mxu0
      %v500 = vadd.f32 %v418, %v499
      %v501 = vpop.f32.mrf.mxu0
      %v502 = vadd.f32 %v418, %v501
      %503 = vdwg.mxu0
      %v504 = vmax.f32 %v494, 0.0
      %v505 = vmax.f32 %v496, 0.0
      %v506 = vmax.f32 %v500, 0.0
      %v507 = vmax.f32 %v502, 0.0
      %508 = vst [vmem:[%s170] sm:$0xff] %v504
      %509 = vst [vmem:[%s170 + $0x8] sm:$0xff] %v505
      %510 = vst [vmem:[%s170 + $0x10] sm:$0xff] %v506
      %511 = vst [vmem:[%s170 + $0x18] sm:$0xff] %v507
      %p512 = scmp.lt.s32.totalorder %s14, 1
      %s513 = scalar_select %p512, %s14, 1
      %s514 = smul.addr %s513, 4
      %s515 = smul.addr %s514, 8
      %s516 = scalar_lea.vmem %s3, %s515
      // Predicated region
      $region33: #{large_module_forward.1} parent=31 // pred_check
        %p517 = pneg %p100
      $region34: #{large_module_forward.1} parent=31 // pred_check_branch
        %519 = sbr.rel (%p517) target = $region36
      $region35: #{large_module_forward.1} parent=31 // pred_region
        _
      $region36: #{large_module_forward.1} parent=31 // pred_fallthru
        _
    $region32: #{large_module_forward.1} parent=5 // pred_fallthru
      _
    %p520 = scmp.le.s32.totalorder 2, %s9
    // Predicated region
    $region37: #{large_module_forward.1} parent=5 // pred_check
      %p521 = pneg %p520
    $region38: #{large_module_forward.1} parent=5 // pred_check_branch
      %523 = sbr.rel (%p521) target = $region40
    $region39: #{large_module_forward.1} parent=5 // pred_region
      %s524 = ssub.s32 %s9, 2
      // Predicated region
      $region41: #{large_module_forward.1} parent=39 // pred_check
        %p525 = pneg %p106
      $region42: #{large_module_forward.1} parent=39 // pred_check_branch
        %527 = sbr.rel (%p525) target = $region44
      $region43: #{large_module_forward.1} parent=39 // pred_region
        %p528 = scmp.lt.s32.totalorder %s15, 1
        %s529 = scalar_select %p528, %s15, 1
        %s530 = smul.addr %s529, 4
        %s531 = smul.addr %s530, 8
        %s532 = scalar_lea.vmem %s3, %s531
      $region44: #{large_module_forward.1} parent=39 // pred_fallthru
        _
    $region40: #{large_module_forward.1} parent=5 // pred_fallthru
      _
  $region6: #{large_module_forward.1} parent=0 // loop_footer
    %s13 = sadd.s32 1, %s9
  $region7: #{large_module_forward.1} parent=0 // loop_footer_branch
    %8 = sbr.rel target = $region3
  $region8: #{large_module_forward.1} parent=0 // loop_exit
    _

</llo_original>
